<compile_context>
chip_gen: v7x
topology: tpu7x:2x2x1
jax: 0.10.0
libtpu: 0.0.40
codegen_flags: <defaults>
</compile_context>

<pallas_src>
import jax
import jax.numpy as jnp
from jax.experimental import pallas as pl
from jax.experimental.pallas import tpu as pltpu

ALPHA = 0.85      # propagation teleport factor
K_PROP = 3        # number of propagation steps
NIDX_PAD = 128    # lane-dense output / idx-row width (one full vreg lane row)
SLAB_ROWS = 8     # (8, 128) packed small-operand slab


def dgisp_kernel(nn_ref, xw_ref, slab_ref, out_ref):
    """Fused GCN layer + collapsed seed propagation + lane-dense idx gather.

    nn_ref   : [2N, N]  stacked [a_norm ; alpha^K A^K]
    xw_ref   : [N, H]   precomputed X @ W1
    slab_ref : [8, 128] packed f32 slab:
                 row 0: b1 (lanes 0:H)    row 1: w2 (lanes 0:H)
                 row 2: prop_s (lanes 0:N, as a row)
                 row 3: idx as f32, padded with -1 (lanes 0:NIDX_PAD)
    out_ref  : [1, NIDX_PAD] lane-dense gathered predictions
    """
    n_nodes = xw_ref.shape[0]
    hidden = xw_ref.shape[1]
    n_out = out_ref.shape[1]

    nn = nn_ref[...]                                 # [2N, N], single load
    a_norm = nn[:n_nodes, :]                         # [N, N]
    prop_m = nn[n_nodes:, :]                         # [N, N]  alpha^K A^K

    slab = slab_ref[...]                             # [8, 128]
    b1 = slab[0:1, 0:hidden]                         # [1, H]
    w2 = slab[1:2, 0:hidden]                         # [1, H]
    s_row = slab[2:3, 0:n_nodes]                     # [1, N]
    idx_row = slab[3:4, :].astype(jnp.int32)         # [1, NIDX_PAD], pad = -1

    # --- GCN layer (X @ W1 folded at setup): H = relu(A @ XW1 + b1) --------
    h = jnp.dot(a_norm, xw_ref[...], preferred_element_type=jnp.float32) + b1
    h = jnp.maximum(h, 0.0)                          # [N, H]

    # --- collapsed propagation + regression head ---------------------------
    #   p = M @ (H @ w2 + b2) + s0 = (M @ H) @ w2 + s_full
    # (M @ H) keeps the MXU matmul wide; the 1-column w2 contraction runs on
    # the VPU/XLU instead of a [N,H]@[H,1] MXU sliver.
    g = jnp.dot(prop_m, h, preferred_element_type=jnp.float32)       # [N, H]
    head = jnp.sum(g * w2, axis=-1, keepdims=True)                   # [N, 1]

    # --- fused lane-dense gather: sel[n, j] = (idx[j] == n) -----------------
    # single broadcast + compare (no per-index scalar loop); padded lanes
    # (idx = -1) never match and therefore produce 0.
    node = jax.lax.broadcasted_iota(jnp.int32, (n_nodes, n_out), 0)
    sel = (node == idx_row).astype(jnp.float32)                      # [N, NIDX_PAD]

    head_g = jnp.sum(head * sel, axis=0, keepdims=True)              # VPU + XLU
    s_g = jnp.dot(s_row, sel, preferred_element_type=jnp.float32)    # idle MXU
    out_ref[...] = head_g + s_g                                      # [1, NIDX_PAD]


def precompute_setup(x, a_norm, w1, b1, w2, b2, alpha=ALPHA, k=K_PROP):
    """One-time per-graph/per-weights setup (runs once, outside the kernel).

    Collapses the K linear propagation steps into (M, s_full):
        p_K = M @ pred + s0,   M  = alpha^K A^K,
        s0  = (1-alpha) * sum_{t<K} (alpha A)^t @ seed,
        s_full = s0 + b2 * M.sum(axis=1)      (folds the head bias b2).
    Also folds X @ W1 and packs the small operands into an (8,128) slab.
    NOTE: if A, seed, alpha, K, W1 or b2 change, this must be re-run.
    """
    n = a_norm.shape[0]
    hd = w1.shape[1]

    # seed mask = argwhere(features.weight[:, 0] == 1), as in the torch module
    seed = (x[:, 0:1] == 1.0).astype(jnp.float32)                    # [N, 1]

    m = jnp.eye(n, dtype=jnp.float32)
    s0 = jnp.zeros((n, 1), jnp.float32)
    for _ in range(k):
        s0 = s0 + (1.0 - alpha) * (m @ seed)
        m = alpha * (a_norm @ m)
    s_full = s0 + b2[0, 0] * jnp.sum(m, axis=1, keepdims=True)       # [N, 1]

    xw1 = (x @ w1).astype(jnp.float32)                               # [N, H]
    nn_stack = jnp.concatenate([a_norm, m], axis=0)                  # [2N, N]

    slab = jnp.zeros((SLAB_ROWS, NIDX_PAD), jnp.float32)
    slab = slab.at[0, :hd].set(b1[0, :])
    slab = slab.at[1, :hd].set(w2[:, 0])
    slab = slab.at[2, :n].set(s_full[:, 0])
    # row 3 (idx) is filled per forward call.
    return nn_stack, xw1, slab


def dgisp_forward(idx, nn_stack, xw1, slab_static):
    """Returns predictions.flatten() for the requested node indices."""
    n, hd = xw1.shape
    n_idx = idx.shape[0]
    assert n_idx <= NIDX_PAD

    # Lane-dense idx row (f32 is exact for node ids); -1 marks padded lanes.
    idx_row = jnp.full((NIDX_PAD,), -1.0, jnp.float32)
    idx_row = idx_row.at[:n_idx].set(idx.astype(jnp.float32))
    slab = slab_static.at[3, :].set(idx_row)

    grid_spec = pltpu.PrefetchScalarGridSpec(
        num_scalar_prefetch=0,
        grid=(1,),
        in_specs=[
            pl.BlockSpec((2 * n, n), lambda i: (0, 0)),        # [a_norm; prop_m]
            pl.BlockSpec((n, hd), lambda i: (0, 0)),           # X @ W1
            pl.BlockSpec((SLAB_ROWS, NIDX_PAD), lambda i: (0, 0)),  # packed slab
        ],
        out_specs=pl.BlockSpec((1, NIDX_PAD), lambda i: (0, 0)),
    )

    out_row = pl.pallas_call(
        dgisp_kernel,
        out_shape=jax.ShapeDtypeStruct((1, NIDX_PAD), jnp.float32),
        grid_spec=grid_spec,
        compiler_params=pltpu.CompilerParams(
            dimension_semantics=("arbitrary",)),
    )(nn_stack, xw1, slab)

    # "the index just indicates which values to be fetched" -> already
    # gathered in-kernel; drop lane padding and flatten.
    return out_row[0, :n_idx]


def make_params(key, n_nodes, n_feat, n_hidden):
    k_feat, k_adj, k_w1, k_w2 = jax.random.split(key, 4)

    # Embedding table.  First column is a 0/1 seed indicator so that
    # `features.weight[:, 0] == 1` selects a deterministic seed set.
    feat_rest = 0.1 * jax.random.normal(k_feat, (n_nodes, n_feat - 1), jnp.float32)
    seed_col = (jnp.arange(n_nodes) % 8 == 0).astype(jnp.float32)[:, None]
    x = jnp.concatenate([seed_col, feat_rest], axis=1)               # [N, F]

    # Random row-normalized adjacency with self loops.
    logits = jax.random.uniform(k_adj, (n_nodes, n_nodes), jnp.float32)
    adj = (logits > 0.7).astype(jnp.float32) + jnp.eye(n_nodes, dtype=jnp.float32)
    a_norm = adj / jnp.sum(adj, axis=1, keepdims=True)               # [N, N]

    w1 = 0.1 * jax.random.normal(k_w1, (n_feat, n_hidden), jnp.float32)
    b1 = jnp.zeros((1, n_hidden), jnp.float32)
    w2 = 0.1 * jax.random.normal(k_w2, (n_hidden, 1), jnp.float32)
    b2 = jnp.zeros((1, 1), jnp.float32)
    return x, a_norm, w1, b1, w2, b2


if __name__ == "__main__":
    N_NODES, N_FEAT, N_HIDDEN = 64, 16, 32

    key = jax.random.PRNGKey(0)
    x, a_norm, w1, b1, w2, b2 = make_params(key, N_NODES, N_FEAT, N_HIDDEN)

    # one-time per-graph/per-weights setup (outside the kernel)
    nn_stack, xw1, slab_static = precompute_setup(x, a_norm, w1, b1, w2, b2)

    # node indices we want to fetch (the torch forward's `idx` argument)
    idx = jnp.array([0, 3, 7, 12, 20, 33, 47, 63], dtype=jnp.int32)

    out = dgisp_forward(idx, nn_stack, xw1, slab_static)
    out = jax.block_until_ready(out)

    # reference check in plain JAX (original, un-collapsed math)
    seed = (x[:, 0:1] == 1.0).astype(jnp.float32)
    h_ref = jnp.maximum(a_norm @ (x @ w1) + b1, 0.0)
    p_ref = h_ref @ w2 + b2
    for _ in range(K_PROP):
        p_ref = ALPHA * (a_norm @ p_ref) + (1.0 - ALPHA) * seed
    ref = jnp.take(p_ref[:, 0], idx, axis=0)

    assert out.shape == (idx.shape[0],)
    assert jnp.allclose(out, ref, atol=1e-4, rtol=1e-3), (out, ref)
    print("KERNEL_OK")
</pallas_src>

<mosaic_0001>
module attributes {stable_mosaic.version = 11 : i64} {
  func.func @dgisp_kernel(%arg0: i32, %arg1: memref<128x64xf32, #tpu.memory_space<vmem>>, %arg2: memref<64x32xf32, #tpu.memory_space<vmem>>, %arg3: memref<8x128xf32, #tpu.memory_space<vmem>>, %arg4: memref<1x128xf32, #tpu.memory_space<vmem>>) attributes {dimension_semantics = [#tpu.dimension_semantics<arbitrary>], iteration_bounds = array<i64: 1>, scalar_prefetch = 0 : i64, scratch_operands = 0 : i64, tpu.core_type = #tpu.core_type<tc>, window_params = [{pipeline_mode = #tpu.pipeline_mode<synchronous>, transform_indices = @transform_0, window_bounds = array<i64: 128, 64>}, {pipeline_mode = #tpu.pipeline_mode<synchronous>, transform_indices = @transform_1, window_bounds = array<i64: 64, 32>}, {pipeline_mode = #tpu.pipeline_mode<synchronous>, transform_indices = @transform_2, window_bounds = array<i64: 8, 128>}, {pipeline_mode = #tpu.pipeline_mode<synchronous>, transform_indices = @transform_3, window_bounds = array<i64: 1, 128>}]} {
    %c0 = arith.constant 0 : index
    %c0_0 = arith.constant 0 : index
    %0 = vector.load %arg1[%c0, %c0_0] : memref<128x64xf32, #tpu.memory_space<vmem>>, vector<128x64xf32>
    %1 = vector.extract_strided_slice %0 {offsets = [0, 0], sizes = [64, 64], strides = [1, 1]} : vector<128x64xf32> to vector<64x64xf32>
    %2 = vector.extract_strided_slice %0 {offsets = [64, 0], sizes = [64, 64], strides = [1, 1]} : vector<128x64xf32> to vector<64x64xf32>
    %c0_1 = arith.constant 0 : index
    %c0_2 = arith.constant 0 : index
    %3 = vector.load %arg3[%c0_1, %c0_2] : memref<8x128xf32, #tpu.memory_space<vmem>>, vector<8x128xf32>
    %4 = vector.extract_strided_slice %3 {offsets = [0, 0], sizes = [1, 32], strides = [1, 1]} : vector<8x128xf32> to vector<1x32xf32>
    %5 = vector.extract_strided_slice %3 {offsets = [1, 0], sizes = [1, 32], strides = [1, 1]} : vector<8x128xf32> to vector<1x32xf32>
    %6 = vector.extract_strided_slice %3 {offsets = [2, 0], sizes = [1, 64], strides = [1, 1]} : vector<8x128xf32> to vector<1x64xf32>
    %7 = vector.extract_strided_slice %3 {offsets = [3, 0], sizes = [1, 128], strides = [1, 1]} : vector<8x128xf32> to vector<1x128xf32>
    %8 = arith.fptosi %7 : vector<1x128xf32> to vector<1x128xi32>
    %c0_3 = arith.constant 0 : index
    %c0_4 = arith.constant 0 : index
    %9 = vector.load %arg2[%c0_3, %c0_4] : memref<64x32xf32, #tpu.memory_space<vmem>>, vector<64x32xf32>
    %cst = arith.constant dense<0.000000e+00> : vector<64x32xf32>
    %10 = tpu.matmul %1, %9, %cst {dimension_numbers = #tpu.dot_dimension_numbers<[1], [0], [0], [1], [0, 0, 1, 1], [], []>} : vector<64x64xf32>, vector<64x32xf32>, vector<64x32xf32> -> vector<64x32xf32>
    %11 = vector.broadcast %4 : vector<1x32xf32> to vector<64x32xf32>
    %12 = arith.addf %10, %11 : vector<64x32xf32>
    %cst_5 = arith.constant 0.000000e+00 : f32
    %13 = vector.broadcast %cst_5 : f32 to vector<64x32xf32>
    %14 = arith.maximumf %12, %13 : vector<64x32xf32>
    %cst_6 = arith.constant dense<0.000000e+00> : vector<64x32xf32>
    %15 = tpu.matmul %2, %14, %cst_6 {dimension_numbers = #tpu.dot_dimension_numbers<[1], [0], [0], [1], [0, 0, 1, 1], [], []>} : vector<64x64xf32>, vector<64x32xf32>, vector<64x32xf32> -> vector<64x32xf32>
    %16 = vector.broadcast %5 : vector<1x32xf32> to vector<64x32xf32>
    %17 = arith.mulf %15, %16 : vector<64x32xf32>
    %cst_7 = arith.constant dense<0.000000e+00> : vector<64xf32>
    %18 = vector.multi_reduction <add>, %17, %cst_7 [1] : vector<64x32xf32> to vector<64xf32>
    %19 = vector.shape_cast %18 : vector<64xf32> to vector<64x1xf32>
    %20 = tpu.iota {dimensions = array<i32: 0>} : vector<64x128xi32>
    %21 = vector.broadcast %8 : vector<1x128xi32> to vector<64x128xi32>
    %22 = arith.cmpi eq, %20, %21 : vector<64x128xi32>
    %23 = arith.extui %22 : vector<64x128xi1> to vector<64x128xi32>
    %24 = arith.sitofp %23 : vector<64x128xi32> to vector<64x128xf32>
    %25 = vector.broadcast %19 : vector<64x1xf32> to vector<64x128xf32>
    %26 = arith.mulf %25, %24 : vector<64x128xf32>
    %cst_8 = arith.constant dense<0.000000e+00> : vector<128xf32>
    %27 = vector.multi_reduction <add>, %26, %cst_8 [0] : vector<64x128xf32> to vector<128xf32>
    %28 = vector.shape_cast %27 : vector<128xf32> to vector<1x128xf32>
    %cst_9 = arith.constant dense<0.000000e+00> : vector<1x128xf32>
    %29 = tpu.matmul %6, %24, %cst_9 {dimension_numbers = #tpu.dot_dimension_numbers<[1], [0], [0], [1], [0, 0, 1, 1], [], []>} : vector<1x64xf32>, vector<64x128xf32>, vector<1x128xf32> -> vector<1x128xf32>
    %30 = arith.addf %28, %29 : vector<1x128xf32>
    %c0_10 = arith.constant 0 : index
    %c0_11 = arith.constant 0 : index
    %31 = vector.load %arg4[%c0_10, %c0_11] : memref<1x128xf32, #tpu.memory_space<vmem>>, vector<1x128xf32>
    tpu.vector_store %arg4[%c0_10, %c0_11], %30 {strides = array<i32>} : memref<1x128xf32, #tpu.memory_space<vmem>>, vector<1x128xf32>,
    return
  }
  func.func @transform_0(%arg0: i32) -> (i32, i32) {
    %c0_i32 = arith.constant 0 : i32
    %c0_i32_0 = arith.constant 0 : i32
    %c0_i32_1 = arith.constant 0 : i32
    return %c0_i32, %c0_i32_0 : i32, i32
  }
  func.func @transform_1(%arg0: i32) -> (i32, i32) {
    %c0_i32 = arith.constant 0 : i32
    %c0_i32_0 = arith.constant 0 : i32
    %c0_i32_1 = arith.constant 0 : i32
    return %c0_i32, %c0_i32_0 : i32, i32
  }
  func.func @transform_2(%arg0: i32) -> (i32, i32) {
    %c0_i32 = arith.constant 0 : i32
    %c0_i32_0 = arith.constant 0 : i32
    %c0_i32_1 = arith.constant 0 : i32
    return %c0_i32, %c0_i32_0 : i32, i32
  }
  func.func @transform_3(%arg0: i32) -> (i32, i32) {
    %c0_i32 = arith.constant 0 : i32
    %c0_i32_0 = arith.constant 0 : i32
    %c0_i32_1 = arith.constant 0 : i32
    return %c0_i32, %c0_i32_0 : i32, i32
  }
}

</mosaic_0001>

<llo_original>
// kernel: tpu_custom_call.1
$region0: #{tpu_custom_call.1}
  #allocation0 [shape = 'u32[]', space=smem, size = 0x4, offset = 0x4, fixed_abs, tag = 'smem constant byte address 0x4 - core index']
  #allocation1 [shape = 'u32[144,128]{1,0:T(1,128)}', space=vmem, size = 0x12000, scoped, tag = 'internal scratch']
  %s0 = inlined_call_operand.vmem [shape: f32[128,64], index: 0, kind: input, shape index: {}]
  %s1 = inlined_call_operand.vmem [shape: f32[64,32], index: 1, kind: input, shape index: {}]
  %s2 = inlined_call_operand.vmem [shape: f32[8,128], index: 2, kind: input, shape index: {}]
  %s3 = inlined_call_operand.hbm [shape: f32[1,128], index: 3, kind: output, shape index: {}]
  %s4 = sld [smem:[#allocation0]]
  $region22: #{tpu_custom_call.1} parent=0
    _
  %s6 = ssub.s32 1, %s4
  %s7 = scalar_select 0, %s6, %s4
  $region1: #{tpu_custom_call.1} parent=0
    #allocation2 [shape = 'u8[512]{0}', space=vmem, size = 0x400, scoped, tag = 'output window, operand 0, single buffered']
    #allocation3 [shape = 's32[1]{0}', space=sflag, size = 0x4, scoped, tag = 'scoped memory for tpu_custom_call.1']
    %8 = vsyncpa [#allocation3], 0
    // Predicated region
    $region2: #{tpu_custom_call.1} parent=1 // pred_check
      _
    $region3: #{tpu_custom_call.1} parent=1 // pred_check_branch
      %10 = sbr.rel (0) target = $region5
    $region4: #{tpu_custom_call.1} parent=1 // pred_region
      _
    $region5: #{tpu_custom_call.1} parent=1 // pred_fallthru
      _
    // Predicated region
    $region6: #{tpu_custom_call.1} parent=1 // pred_check
      _
    $region7: #{tpu_custom_call.1} parent=1 // pred_check_branch
      %12 = sbr.rel (0) target = $region9
    $region8: #{tpu_custom_call.1} parent=1 // pred_region
      _
    $region9: #{tpu_custom_call.1} parent=1 // pred_fallthru
      _
    // Predicated region
    $region10: #{tpu_custom_call.1} parent=1 // pred_check
      _
    $region11: #{tpu_custom_call.1} parent=1 // pred_check_branch
      %14 = sbr.rel (0) target = $region13
    $region12: #{tpu_custom_call.1} parent=1 // pred_region
      _
    $region13: #{tpu_custom_call.1} parent=1 // pred_fallthru
      _
    %v15 = vld [vmem:[%s0] sm:$0xff]
    %v16 = vld [vmem:[%s0 + $0x8] sm:$0xff]
    %v17 = vld [vmem:[%s0 + $0x10] sm:$0xff]
    %v18 = vld [vmem:[%s0 + $0x18] sm:$0xff]
    %v19 = vld [vmem:[%s0 + $0x20] sm:$0xff]
    %v20 = vld [vmem:[%s0 + $0x28] sm:$0xff]
    %v21 = vld [vmem:[%s0 + $0x30] sm:$0xff]
    %v22 = vld [vmem:[%s0 + $0x38] sm:$0xff]
    %v23 = vld [vmem:[%s0 + $0x40] sm:$0xff]
    %v24 = vld [vmem:[%s0 + $0x48] sm:$0xff]
    %v25 = vld [vmem:[%s0 + $0x50] sm:$0xff]
    %v26 = vld [vmem:[%s0 + $0x58] sm:$0xff]
    %v27 = vld [vmem:[%s0 + $0x60] sm:$0xff]
    %v28 = vld [vmem:[%s0 + $0x68] sm:$0xff]
    %v29 = vld [vmem:[%s0 + $0x70] sm:$0xff]
    %v30 = vld [vmem:[%s0 + $0x78] sm:$0xff]
    %v31 = vld [vmem:[%s2] sm:$0xff]
    %v32 = vcvt.f32.s32.to.zero.pseudo %v31
    %v33 = vld [vmem:[%s1] sm:$0xff]
    %v34 = vld [vmem:[%s1 + $0x8] sm:$0xff]
    %v35 = vld [vmem:[%s1 + $0x10] sm:$0xff]
    %v36 = vld [vmem:[%s1 + $0x18] sm:$0xff]
    %v37 = vld [vmem:[%s1 + $0x20] sm:$0xff]
    %v38 = vld [vmem:[%s1 + $0x28] sm:$0xff]
    %v39 = vld [vmem:[%s1 + $0x30] sm:$0xff]
    %v40 = vld [vmem:[%s1 + $0x38] sm:$0xff]
    %v41 = vlaneseq
    %v42 = vshrl.u32 %v41, 7
    %v43 = vsub.s32 0, %v42
    %v44 = vrot.slane %v31, %v43
    %vm45 = vcmask 523264
    %v47 = vsel %vm45, %v15, 0
    %v50 = vsel %vm45, %v16, 0
    %v53 = vsel %vm45, %v17, 0
    %v56 = vsel %vm45, %v18, 0
    %v59 = vsel %vm45, %v19, 0
    %v62 = vsel %vm45, %v20, 0
    %v65 = vsel %vm45, %v21, 0
    %v68 = vsel %vm45, %v22, 0
    %70 = vmatprep.subr.mxu0 0.0
    %71 = vmatpush1.msra.mxu0 %v33
    %72 = vmatprep.subr.mxu0 0.0
    %73 = vmatpush1.msra.mxu0 %v34
    %74 = vmatprep.subr.mxu0 0.0
    %75 = vmatpush1.msra.mxu0 %v35
    %76 = vmatprep.subr.mxu0 0.0
    %77 = vmatpush1.msra.mxu0 %v36
    %78 = vmatprep.subr.mxu0 0.0
    %79 = vmatpush1.msra.mxu0 %v37
    %80 = vmatprep.subr.mxu0 0.0
    %81 = vmatpush1.msra.mxu0 %v38
    %82 = vmatprep.subr.mxu0 0.0
    %83 = vmatpush1.msra.mxu0 %v39
    %84 = vmatprep.subr.mxu0 0.0
    %85 = vmatpush1.msra.mxu0 %v40
    %86 = vmatprep.subr.mxu0 0.0
    %87 = vmatpush1.msra.mxu0 0.0
    %88 = vmatprep.subr.mxu0 0.0
    %89 = vmatpush1.msra.mxu0 0.0
    %90 = vmatprep.subr.mxu0 0.0
    %91 = vmatpush1.msra.mxu0 0.0
    %92 = vmatprep.subr.mxu0 0.0
    %93 = vmatpush1.msra.mxu0 0.0
    %94 = vmatprep.subr.mxu0 0.0
    %95 = vmatpush1.msra.mxu0 0.0
    %96 = vmatprep.subr.mxu0 0.0
    %97 = vmatpush1.msra.mxu0 0.0
    %98 = vmatprep.subr.mxu0 0.0
    %99 = vmatpush1.msra.mxu0 0.0
    %100 = vmatprep.subr.mxu0 0.0
    %101 = vmatpush1.msra.mxu0 0.0
    %102 = vmatprep.subr.mxu0 0.0
    %103 = vmatpush1.msra.mxu0 0.0
    %104 = vmatprep.subr.mxu0 0.0
    %105 = vmatpush1.msra.mxu0 0.0
    %106 = vmatprep.subr.mxu0 0.0
    %107 = vmatpush1.msra.mxu0 0.0
    %108 = vmatprep.subr.mxu0 0.0
    %109 = vmatpush1.msra.mxu0 0.0
    %110 = vmatprep.subr.mxu0 0.0
    %111 = vmatpush1.msra.mxu0 0.0
    %112 = vmatprep.subr.mxu0 0.0
    %113 = vmatpush1.msra.mxu0 0.0
    %114 = vmatprep.subr.mxu0 0.0
    %115 = vmatpush1.msra.mxu0 0.0
    %116 = vmatprep.subr.mxu0 0.0
    %117 = vmatpush1.msra.mxu0 0.0
    %118 = vmatprep.subr.mxu0 0.0
    %119 = vmatpush1.msra.mxu0 0.0
    %120 = vmatprep.subr.mxu0 0.0
    %121 = vmatpush1.msra.mxu0 0.0
    %122 = vmatprep.subr.mxu0 0.0
    %123 = vmatpush1.msra.mxu0 0.0
    %124 = vmatprep.subr.mxu0 0.0
    %125 = vmatpush1.msra.mxu0 0.0
    %126 = vmatprep.subr.mxu0 0.0
    %127 = vmatpush1.msra.mxu0 0.0
    %128 = vmatprep.subr.mxu0 0.0
    %129 = vmatpush1.msra.mxu0 0.0
    %130 = vmatprep.subr.mxu0 0.0
    %131 = vmatpush1.msra.mxu0 0.0
    %132 = vmatprep.subr.mxu0 0.0
    %133 = vmatpush1.msra.mxu0 0.0
    %134 = vmatprep.mubr.f32.mxu0 0.0
    %135 = vmatmul.mubr.f32.gmra.mrb[0].mxu0 %v47
    %v136 = vpop.f32.mrb[0].mxu0
    %v137 = vadd.f32 %v44, %v136
    %v138 = vpop.f32.mrb[0].mxu0
    %139 = vmatprep.mubr.f32.mxu0 0.0
    %140 = vmatmul.mubr.f32.gmra.mrb[0].mxu0 %v50
    %v141 = vpop.f32.mrb[0].mxu0
    %v142 = vadd.f32 %v44, %v141
    %v143 = vpop.f32.mrb[0].mxu0
    %144 = vmatprep.mubr.f32.mxu0 0.0
    %145 = vmatmul.mubr.f32.gmra.mrb[0].mxu0 %v53
    %v146 = vpop.f32.mrb[0].mxu0
    %v147 = vadd.f32 %v44, %v146
    %v148 = vpop.f32.mrb[0].mxu0
    %149 = vmatprep.mubr.f32.mxu0 0.0
    %150 = vmatmul.mubr.f32.gmra.mrb[0].mxu0 %v56
    %v151 = vpop.f32.mrb[0].mxu0
    %v152 = vadd.f32 %v44, %v151
    %v153 = vpop.f32.mrb[0].mxu0
    %154 = vmatprep.mubr.f32.mxu0 0.0
    %155 = vmatmul.mubr.f32.gmra.mrb[0].mxu0 %v59
    %v156 = vpop.f32.mrb[0].mxu0
    %v157 = vadd.f32 %v44, %v156
    %v158 = vpop.f32.mrb[0].mxu0
    %159 = vmatprep.mubr.f32.mxu0 0.0
    %160 = vmatmul.mubr.f32.gmra.mrb[0].mxu0 %v62
    %v161 = vpop.f32.mrb[0].mxu0
    %v162 = vadd.f32 %v44, %v161
    %v163 = vpop.f32.mrb[0].mxu0
    %164 = vmatprep.mubr.f32.mxu0 0.0
    %165 = vmatmul.mubr.f32.gmra.mrb[0].mxu0 %v65
    %v166 = vpop.f32.mrb[0].mxu0
    %v167 = vadd.f32 %v44, %v166
    %v168 = vpop.f32.mrb[0].mxu0
    %169 = vmatprep.mubr.f32.mxu0 0.0
    %170 = vmatmul.mubr.f32.gmra.mrb[0].mxu0 %v68
    %v171 = vpop.f32.mrb[0].mxu0
    %v172 = vadd.f32 %v44, %v171
    %v173 = vpop.f32.mrb[0].mxu0
    %174 = vdwg.mxu0
    %v175 = vmax.f32 %v137, 0.0
    %v176 = vmax.f32 %v142, 0.0
    %v177 = vmax.f32 %v147, 0.0
    %v178 = vmax.f32 %v152, 0.0
    %v179 = vmax.f32 %v157, 0.0
    %v180 = vmax.f32 %v162, 0.0
    %v181 = vmax.f32 %v167, 0.0
    %v182 = vmax.f32 %v172, 0.0
    %v184 = vsel %vm45, %v23, 0
    %v187 = vsel %vm45, %v24, 0
    %v190 = vsel %vm45, %v25, 0
    %v193 = vsel %vm45, %v26, 0
    %v196 = vsel %vm45, %v27, 0
    %v199 = vsel %vm45, %v28, 0
    %v202 = vsel %vm45, %v29, 0
    %v205 = vsel %vm45, %v30, 0
    %207 = vmatprep.subr.mxu0 0.0
    %208 = vmatpush1.msra.mxu0 %v175
    %209 = vmatprep.subr.mxu0 0.0
    %210 = vmatpush1.msra.mxu0 %v176
    %211 = vmatprep.subr.mxu0 0.0
    %212 = vmatpush1.msra.mxu0 %v177
    %213 = vmatprep.subr.mxu0 0.0
    %214 = vmatpush1.msra.mxu0 %v178
    %215 = vmatprep.subr.mxu0 0.0
    %216 = vmatpush1.msra.mxu0 %v179
    %217 = vmatprep.subr.mxu0 0.0
    %218 = vmatpush1.msra.mxu0 %v180
    %219 = vmatprep.subr.mxu0 0.0
    %220 = vmatpush1.msra.mxu0 %v181
    %221 = vmatprep.subr.mxu0 0.0
    %222 = vmatpush1.msra.mxu0 %v182
    %223 = vmatprep.subr.mxu0 0.0
    %224 = vmatpush1.msra.mxu0 0.0
    %225 = vmatprep.subr.mxu0 0.0
    %226 = vmatpush1.msra.mxu0 0.0
    %227 = vmatprep.subr.mxu0 0.0
    %228 = vmatpush1.msra.mxu0 0.0
    %229 = vmatprep.subr.mxu0 0.0
    %230 = vmatpush1.msra.mxu0 0.0
    %231 = vmatprep.subr.mxu0 0.0
    %232 = vmatpush1.msra.mxu0 0.0
    %233 = vmatprep.subr.mxu0 0.0
    %234 = vmatpush1.msra.mxu0 0.0
    %235 = vmatprep.subr.mxu0 0.0
    %236 = vmatpush1.msra.mxu0 0.0
    %237 = vmatprep.subr.mxu0 0.0
    %238 = vmatpush1.msra.mxu0 0.0
    %239 = vmatprep.subr.mxu0 0.0
    %240 = vmatpush1.msra.mxu0 0.0
    %241 = vmatprep.subr.mxu0 0.0
    %242 = vmatpush1.msra.mxu0 0.0
    %243 = vmatprep.subr.mxu0 0.0
    %244 = vmatpush1.msra.mxu0 0.0
    %245 = vmatprep.subr.mxu0 0.0
    %246 = vmatpush1.msra.mxu0 0.0
    %247 = vmatprep.subr.mxu0 0.0
    %248 = vmatpush1.msra.mxu0 0.0
    %249 = vmatprep.subr.mxu0 0.0
    %250 = vmatpush1.msra.mxu0 0.0
    %251 = vmatprep.subr.mxu0 0.0
    %252 = vmatpush1.msra.mxu0 0.0
    %253 = vmatprep.subr.mxu0 0.0
    %254 = vmatpush1.msra.mxu0 0.0
    %255 = vmatprep.subr.mxu0 0.0
    %256 = vmatpush1.msra.mxu0 0.0
    %257 = vmatprep.subr.mxu0 0.0
    %258 = vmatpush1.msra.mxu0 0.0
    %259 = vmatprep.subr.mxu0 0.0
    %260 = vmatpush1.msra.mxu0 0.0
    %261 = vmatprep.subr.mxu0 0.0
    %262 = vmatpush1.msra.mxu0 0.0
    %263 = vmatprep.subr.mxu0 0.0
    %264 = vmatpush1.msra.mxu0 0.0
    %265 = vmatprep.subr.mxu0 0.0
    %266 = vmatpush1.msra.mxu0 0.0
    %267 = vmatprep.subr.mxu0 0.0
    %268 = vmatpush1.msra.mxu0 0.0
    %269 = vmatprep.subr.mxu0 0.0
    %270 = vmatpush1.msra.mxu0 0.0
    %271 = vmatprep.mubr.f32.mxu0 0.0
    %272 = vmatmul.mubr.f32.gmra.mrb[0].mxu0 %v184
    %v273 = vpop.f32.mrb[0].mxu0
    %v274 = vadd.f32 0.0, %v273
    %v275 = vpop.f32.mrb[0].mxu0
    %276 = vmatprep.mubr.f32.mxu0 0.0
    %277 = vmatmul.mubr.f32.gmra.mrb[0].mxu0 %v187
    %v278 = vpop.f32.mrb[0].mxu0
    %v279 = vadd.f32 0.0, %v278
    %v280 = vpop.f32.mrb[0].mxu0
    %281 = vmatprep.mubr.f32.mxu0 0.0
    %282 = vmatmul.mubr.f32.gmra.mrb[0].mxu0 %v190
    %v283 = vpop.f32.mrb[0].mxu0
    %v284 = vadd.f32 0.0, %v283
    %v285 = vpop.f32.mrb[0].mxu0
    %286 = vmatprep.mubr.f32.mxu0 0.0
    %287 = vmatmul.mubr.f32.gmra.mrb[0].mxu0 %v193
    %v288 = vpop.f32.mrb[0].mxu0
    %v289 = vadd.f32 0.0, %v288
    %v290 = vpop.f32.mrb[0].mxu0
    %291 = vmatprep.mubr.f32.mxu0 0.0
    %292 = vmatmul.mubr.f32.gmra.mrb[0].mxu0 %v196
    %v293 = vpop.f32.mrb[0].mxu0
    %v294 = vadd.f32 0.0, %v293
    %v295 = vpop.f32.mrb[0].mxu0
    %296 = vmatprep.mubr.f32.mxu0 0.0
    %297 = vmatmul.mubr.f32.gmra.mrb[0].mxu0 %v199
    %v298 = vpop.f32.mrb[0].mxu0
    %v299 = vadd.f32 0.0, %v298
    %v300 = vpop.f32.mrb[0].mxu0
    %301 = vmatprep.mubr.f32.mxu0 0.0
    %302 = vmatmul.mubr.f32.gmra.mrb[0].mxu0 %v202
    %v303 = vpop.f32.mrb[0].mxu0
    %v304 = vadd.f32 0.0, %v303
    %v305 = vpop.f32.mrb[0].mxu0
    %306 = vmatprep.mubr.f32.mxu0 0.0
    %307 = vmatmul.mubr.f32.gmra.mrb[0].mxu0 %v205
    %v308 = vpop.f32.mrb[0].mxu0
    %v309 = vadd.f32 0.0, %v308
    %v310 = vpop.f32.mrb[0].mxu0
    %311 = vdwg.mxu0
    %v312 = vlaneseq
    %v313 = vshrl.u32 %v312, 7
    %v314 = vsub.s32 1, %v313
    %v315 = vrot.slane %v31, %v314
    %v316 = vmul.f32 %v274, %v315
    %v317 = vmul.f32 %v279, %v315
    %v318 = vmul.f32 %v284, %v315
    %v319 = vmul.f32 %v289, %v315
    %v320 = vmul.f32 %v294, %v315
    %v321 = vmul.f32 %v299, %v315
    %v322 = vmul.f32 %v304, %v315
    %v323 = vmul.f32 %v309, %v315
    %vm324 = vcmask 261120
    %v325 = vsel %vm324, %v316, 0.0
    %326 = vadd.xlane.f32.xlu0 %v325
    %v327 = vpop.xlane.xlu0 %326
    %v328 = vsel %vm324, %v317, 0.0
    %329 = vadd.xlane.f32.xlu0 %v328
    %v330 = vpop.xlane.xlu0 %329
    %v331 = vsel %vm324, %v318, 0.0
    %332 = vadd.xlane.f32.xlu0 %v331
    %v333 = vpop.xlane.xlu0 %332
    %v334 = vsel %vm324, %v319, 0.0
    %335 = vadd.xlane.f32.xlu0 %v334
    %v336 = vpop.xlane.xlu0 %335
    %v337 = vsel %vm324, %v320, 0.0
    %338 = vadd.xlane.f32.xlu0 %v337
    %v339 = vpop.xlane.xlu0 %338
    %v340 = vsel %vm324, %v321, 0.0
    %341 = vadd.xlane.f32.xlu0 %v340
    %v342 = vpop.xlane.xlu0 %341
    %v343 = vsel %vm324, %v322, 0.0
    %344 = vadd.xlane.f32.xlu0 %v343
    %v345 = vpop.xlane.xlu0 %344
    %v346 = vsel %vm324, %v323, 0.0
    %347 = vadd.xlane.f32.xlu0 %v346
    %v348 = vpop.xlane.xlu0 %347
    %v349 = vlaneseq
    %v350 = vshrl.u32 %v349, 7
    %v351 = vadd.s32 %v350, 8
    %v352 = vadd.s32 %v350, 16
    %v353 = vadd.s32 %v350, 24
    %v354 = vadd.s32 %v350, 32
    %v355 = vadd.s32 %v350, 40
    %v356 = vadd.s32 %v350, 48
    %v357 = vadd.s32 %v350, 56
    %v358 = vlaneseq
    %v359 = vshrl.u32 %v358, 7
    %v360 = vsub.s32 3, %v359
    %v361 = vrot.slane %v32, %v360
    %vm362 = vcmp.eq.s32.totalorder %v350, %v361
    %vm363 = vcmp.eq.s32.totalorder %v351, %v361
    %vm364 = vcmp.eq.s32.totalorder %v352, %v361
    %vm365 = vcmp.eq.s32.totalorder %v353, %v361
    %vm366 = vcmp.eq.s32.totalorder %v354, %v361
    %vm367 = vcmp.eq.s32.totalorder %v355, %v361
    %vm368 = vcmp.eq.s32.totalorder %v356, %v361
    %vm369 = vcmp.eq.s32.totalorder %v357, %v361
    %v370 = vsel %vm362, 1, 0
    %v371 = vsel %vm363, 1, 0
    %v372 = vsel %vm364, 1, 0
    %v373 = vsel %vm365, 1, 0
    %v374 = vsel %vm366, 1, 0
    %v375 = vsel %vm367, 1, 0
    %v376 = vsel %vm368, 1, 0
    %v377 = vsel %vm369, 1, 0
    %v378 = vcvt.s32.f32 %v370
    %v379 = vcvt.s32.f32 %v371
    %v380 = vcvt.s32.f32 %v372
    %v381 = vcvt.s32.f32 %v373
    %v382 = vcvt.s32.f32 %v374
    %v383 = vcvt.s32.f32 %v375
    %v384 = vcvt.s32.f32 %v376
    %v385 = vcvt.s32.f32 %v377
    %v386 = vmul.f32 %v327, %v378
    %v387 = vmul.f32 %v330, %v379
    %v388 = vmul.f32 %v333, %v380
    %v389 = vmul.f32 %v336, %v381
    %v390 = vmul.f32 %v339, %v382
    %v391 = vmul.f32 %v342, %v383
    %v392 = vmul.f32 %v345, %v384
    %v393 = vmul.f32 %v348, %v385
    %v394 = vadd.f32 %v386, %v387
    %v395 = vadd.f32 %v394, %v388
    %v396 = vadd.f32 %v395, %v389
    %v397 = vadd.f32 %v396, %v390
    %v398 = vadd.f32 %v397, %v391
    %v399 = vadd.f32 %v398, %v392
    %v400 = vadd.f32 %v399, %v393
    %v401 = vrot.slane %v400, 4
    %v402 = vadd.f32 %v400, %v401
    %v403 = vrot.slane %v402, 2
    %v404 = vadd.f32 %v402, %v403
    %v405 = vrot.slane %v404, 1
    %v406 = vadd.f32 %v404, %v405
    %v408 = vrot.slane %v31, 2
    %v409 = vsel %vm45, %v408, 0
    %411 = vmatprep.subr.mxu0 0.0
    %412 = vmatpush1.msra.mxu0 %v378
    %413 = vmatprep.subr.mxu0 0.0
    %414 = vmatpush1.msra.mxu0 %v379
    %415 = vmatprep.subr.mxu0 0.0
    %416 = vmatpush1.msra.mxu0 %v380
    %417 = vmatprep.subr.mxu0 0.0
    %418 = vmatpush1.msra.mxu0 %v381
    %419 = vmatprep.subr.mxu0 0.0
    %420 = vmatpush1.msra.mxu0 %v382
    %421 = vmatprep.subr.mxu0 0.0
    %422 = vmatpush1.msra.mxu0 %v383
    %423 = vmatprep.subr.mxu0 0.0
    %424 = vmatpush1.msra.mxu0 %v384
    %425 = vmatprep.subr.mxu0 0.0
    %426 = vmatpush1.msra.mxu0 %v385
    %427 = vmatprep.subr.mxu0 0.0
    %428 = vmatpush1.msra.mxu0 0.0
    %429 = vmatprep.subr.mxu0 0.0
    %430 = vmatpush1.msra.mxu0 0.0
    %431 = vmatprep.subr.mxu0 0.0
    %432 = vmatpush1.msra.mxu0 0.0
    %433 = vmatprep.subr.mxu0 0.0
    %434 = vmatpush1.msra.mxu0 0.0
    %435 = vmatprep.subr.mxu0 0.0
    %436 = vmatpush1.msra.mxu0 0.0
    %437 = vmatprep.subr.mxu0 0.0
    %438 = vmatpush1.msra.mxu0 0.0
    %439 = vmatprep.subr.mxu0 0.0
    %440 = vmatpush1.msra.mxu0 0.0
    %441 = vmatprep.subr.mxu0 0.0
    %442 = vmatpush1.msra.mxu0 0.0
    %443 = vmatprep.subr.mxu0 0.0
    %444 = vmatpush1.msra.mxu0 0.0
    %445 = vmatprep.subr.mxu0 0.0
    %446 = vmatpush1.msra.mxu0 0.0
    %447 = vmatprep.subr.mxu0 0.0
    %448 = vmatpush1.msra.mxu0 0.0
    %449 = vmatprep.subr.mxu0 0.0
    %450 = vmatpush1.msra.mxu0 0.0
    %451 = vmatprep.subr.mxu0 0.0
    %452 = vmatpush1.msra.mxu0 0.0
    %453 = vmatprep.subr.mxu0 0.0
    %454 = vmatpush1.msra.mxu0 0.0
    %455 = vmatprep.subr.mxu0 0.0
    %456 = vmatpush1.msra.mxu0 0.0
    %457 = vmatprep.subr.mxu0 0.0
    %458 = vmatpush1.msra.mxu0 0.0
    %459 = vmatprep.subr.mxu0 0.0
    %460 = vmatpush1.msra.mxu0 0.0
    %461 = vmatprep.subr.mxu0 0.0
    %462 = vmatpush1.msra.mxu0 0.0
    %463 = vmatprep.subr.mxu0 0.0
    %464 = vmatpush1.msra.mxu0 0.0
    %465 = vmatprep.subr.mxu0 0.0
    %466 = vmatpush1.msra.mxu0 0.0
    %467 = vmatprep.subr.mxu0 0.0
    %468 = vmatpush1.msra.mxu0 0.0
    %469 = vmatprep.subr.mxu0 0.0
    %470 = vmatpush1.msra.mxu0 0.0
    %471 = vmatprep.subr.mxu0 0.0
    %472 = vmatpush1.msra.mxu0 0.0
    %473 = vmatprep.subr.mxu0 0.0
    %474 = vmatpush1.msra.mxu0 0.0
    %475 = vmatprep.mubr.f32.mxu0 0.0
    %476 = vmatmul.mubr.f32.gmra.mrb[0].mxu0 %v409
    %v477 = vpop.f32.mrb[0].mxu0
    %v478 = vadd.f32 0.0, %v477
    %v479 = vpop.f32.mrb[0].mxu0
    %480 = vdwg.mxu0
    %v481 = vadd.f32 %v406, %v478
    %482 = vst [vmem:[#allocation2] sm:$0x1] %v481
    // Predicated region
    $region14: #{tpu_custom_call.1} parent=1 // pred_check
      _
    $region15: #{tpu_custom_call.1} parent=1 // pred_check_branch
      %484 = sbr.rel (0) target = $region17
    $region16: #{tpu_custom_call.1} parent=1 // pred_region
      %s486 = ssub.s32 16, 16
      %487 = vsyncadd [#allocation3], %s486
      %s489 = sshll.u32 [#allocation2], 4
      %s490 = int_to_ptr.vmem [resolvable:$true] %s489
      %492 = dma.vmem_to_hbm [thread:$0]  %s490, 16, %s3, [#allocation3]
    $region17: #{tpu_custom_call.1} parent=1 // pred_fallthru
      _
    // Predicated region
    $region18: #{tpu_custom_call.1} parent=1 // pred_check
      _
    $region19: #{tpu_custom_call.1} parent=1 // pred_check_branch
      %494 = sbr.rel (0) target = $region21
    $region20: #{tpu_custom_call.1} parent=1 // pred_region
      %495 = dma.done [#allocation3], 16
    $region21: #{tpu_custom_call.1} parent=1 // pred_fallthru
      _
    %496 = vsyncpa [#allocation3], 1

</llo_original>
